<compile_context>
chip_gen: v5e
topology: v5e:2x2
jax: 0.10.0
libtpu: 0.0.40
codegen_flags: <defaults>
</compile_context>

<pallas_src>
import functools

import jax
import jax.numpy as jnp
from jax.experimental import pallas as pl
from jax.experimental.pallas import tpu as pltpu


def _round_up(x, m):
    return (x + m - 1) // m * m


def _swiglu_kernel(x_ref, w1_ref, w2_ref, w3_ref, o_ref, acc_ref):
    j = pl.program_id(2)                      # hidden (reduction) axis, innermost

    @pl.when(j == 0)
    def _init():
        acc_ref[...] = jnp.zeros_like(acc_ref)

    x = x_ref[...]                                                    # (tm, d_model)
    # Gate + up projections share the VMEM-resident x tile; f32 accumulate.
    g = jnp.dot(x, w1_ref[...], preferred_element_type=jnp.float32)  # (tm, tn)
    u = jnp.dot(x, w2_ref[...], preferred_element_type=jnp.float32)  # (tm, tn)
    # SiLU(g) * u in f32, then cast to the weight dtype for the down matmul
    # (standard; expect ~1e-3-level deviation vs. a pure-f32 ref when the
    #  weights are bf16).
    h = (g * jax.nn.sigmoid(g) * u).astype(w3_ref.dtype)
    # Partial down projection for this hidden tile, accumulated in f32.
    acc_ref[...] += jnp.dot(h, w3_ref[...], preferred_element_type=jnp.float32)

    @pl.when(j == pl.num_programs(2) - 1)
    def _finalize():
        o_ref[...] = acc_ref[...].astype(o_ref.dtype)


def _chip_profile():
    """Per-TPU-generation tuning knobs (conservative defaults if unknown)."""
    try:
        kind = jax.devices()[0].device_kind.lower()
    except Exception:
        kind = ""
    if "v7" in kind or "7x" in kind:
        # 64 MiB physical VMEM: tight budget, single-buffer x/out, 2x256 MXU.
        return dict(vmem_budget=52 * 2**20, mxu_rows=256, single_buffer_io=True)
    if "v6" in kind:
        # 128 MiB VMEM, 2x256 MXU: big tiles, generous scoped-VMEM cap.
        return dict(vmem_budget=100 * 2**20, mxu_rows=256, single_buffer_io=False)
    if "v5 lite" in kind or "v5e" in kind or "v5lite" in kind:
        # 128 MiB VMEM, 4x128 MXU.
        return dict(vmem_budget=100 * 2**20, mxu_rows=128, single_buffer_io=False)
    if "v5" in kind or "v4" in kind:
        return dict(vmem_budget=100 * 2**20, mxu_rows=128, single_buffer_io=False)
    return dict(vmem_budget=64 * 2**20, mxu_rows=128, single_buffer_io=False)


def _io_spec(shape, index_map, single_buffer):
    """BlockSpec, single-buffered when requested (block index is hidden-invariant)."""
    if single_buffer:
        try:
            return pl.BlockSpec(shape, index_map, pipeline_mode=pl.Buffered(1))
        except Exception:
            pass  # older jax without pipeline_mode: fall back to double buffering
    return pl.BlockSpec(shape, index_map)


@functools.partial(jax.jit, static_argnames=("tm", "tn", "dn", "mxu_dtype"))
def swiglu_pallas(x, w1, w2, w3, *, tm=512, tn=512, dn=None, mxu_dtype=None):
    """LLaMA-style SwiGLU FFN:  w3( silu(x @ w1) * (x @ w2) ).

    x: (..., d_model); w1, w2: (d_model, hidden); w3: (hidden, d_model).
    Weights are stored (in, out), i.e. transposed vs. nn.Linear's (out, in).
    mxu_dtype: optional MXU input dtype (e.g. jnp.bfloat16 on v5e); f32
      accumulation is kept either way and the output dtype follows x.
    """
    orig_shape = x.shape
    out_dtype = x.dtype
    d_model = orig_shape[-1]
    hidden = w1.shape[1]
    assert w2.shape == (d_model, hidden) and w3.shape == (hidden, d_model)

    if mxu_dtype is not None:
        x, w1, w2, w3 = (a.astype(mxu_dtype) for a in (x, w1, w2, w3))

    x2d = x.reshape(-1, d_model)
    M = x2d.shape[0]
    x_itemsize = jnp.dtype(x2d.dtype).itemsize
    w_itemsize = jnp.dtype(w1.dtype).itemsize

    prof = _chip_profile()
    lane = 128
    sublane = 8 * max(1, 4 // x_itemsize)          # 8 f32 rows, 16 bf16, 32 int8
    row_align = prof["mxu_rows"] if M >= prof["mxu_rows"] else sublane
    nbuf_io = 1 if prof["single_buffer_io"] else 2

    # ---- tile sizes: MXU-row-aligned tokens, lane-aligned hidden / d_model ----
    tm_eff = max(row_align, min(_round_up(tm, row_align), _round_up(M, row_align)))
    tn_eff = max(lane, min(_round_up(tn, lane), _round_up(hidden, lane)))
    if dn is None:
        dn_eff = _round_up(d_model, lane)          # prefer n_d == 1 (no recompute)
    else:
        dn_eff = max(lane, min(_round_up(dn, lane), _round_up(d_model, lane)))

    def vmem_need(tm_, tn_, dn_):
        return (nbuf_io * tm_ * d_model * x_itemsize           # x tile
                + 2 * 2 * d_model * tn_ * w_itemsize           # w1 + w2 (double-buffered)
                + 2 * tn_ * dn_ * w_itemsize                   # w3      (double-buffered)
                + nbuf_io * tm_ * dn_ * x_itemsize             # out tile
                + tm_ * dn_ * 4                                # f32 accumulator
                + tm_ * tn_ * (2 * 4 + w_itemsize))            # g, u (f32) + h intermediates

    # Shrink to the per-chip VMEM budget: d_model tile first (only costs gate/up
    # recompute when n_d > 1), then the hidden tile, then (last resort) tokens.
    for _ in range(64):
        if vmem_need(tm_eff, tn_eff, dn_eff) <= prof["vmem_budget"]:
            break
        if dn_eff > 1024:
            dn_eff = _round_up(dn_eff // 2, lane)
        elif tn_eff > 256:
            tn_eff = _round_up(tn_eff // 2, lane)
        elif dn_eff > lane:
            dn_eff = _round_up(dn_eff // 2, lane)
        elif tn_eff > lane:
            tn_eff = _round_up(tn_eff // 2, lane)
        elif tm_eff > row_align:
            tm_eff = max(row_align, _round_up(tm_eff // 2, row_align))
        else:
            break

    # ---- pad so the grid divides evenly (zero padding is numerically inert) ----
    m_pad = _round_up(M, tm_eff)
    h_pad = _round_up(hidden, tn_eff)
    d_pad = _round_up(d_model, dn_eff)
    if m_pad != M:
        x2d = jnp.pad(x2d, ((0, m_pad - M), (0, 0)))
    if h_pad != hidden:
        w1 = jnp.pad(w1, ((0, 0), (0, h_pad - hidden)))
        w2 = jnp.pad(w2, ((0, 0), (0, h_pad - hidden)))
        w3 = jnp.pad(w3, ((0, h_pad - hidden), (0, 0)))
    if d_pad != d_model:
        w3 = jnp.pad(w3, ((0, 0), (0, d_pad - d_model)))
    n_m, n_d, n_h = m_pad // tm_eff, d_pad // dn_eff, h_pad // tn_eff

    # ---- scheduler hints: count the per-tile weight re-streaming ----
    flops = 4 * m_pad * d_model * h_pad * n_d + 2 * m_pad * h_pad * d_pad
    transcendentals = m_pad * h_pad * n_d
    bytes_accessed = (m_pad * d_model * x_itemsize                       # x (fetched once per m-tile)
                      + n_m * n_d * 2 * d_model * h_pad * w_itemsize     # w1+w2 re-streamed per (m, d_out) tile
                      + n_m * h_pad * d_pad * w_itemsize                 # w3 re-streamed per m-tile
                      + m_pad * d_pad * x_itemsize)                      # output write
    cost = pl.CostEstimate(flops=int(flops), transcendentals=int(transcendentals),
                           bytes_accessed=int(bytes_accessed))

    single = prof["single_buffer_io"]
    grid_spec = pltpu.PrefetchScalarGridSpec(
        num_scalar_prefetch=0,
        grid=(n_m, n_d, n_h),                       # hidden (reduction) axis last
        in_specs=[
            _io_spec((tm_eff, d_model), lambda i, k, j: (i, 0), single),     # x
            pl.BlockSpec((d_model, tn_eff), lambda i, k, j: (0, j)),         # w1
            pl.BlockSpec((d_model, tn_eff), lambda i, k, j: (0, j)),         # w2
            pl.BlockSpec((tn_eff, dn_eff), lambda i, k, j: (j, k)),          # w3
        ],
        out_specs=_io_spec((tm_eff, dn_eff), lambda i, k, j: (i, k), single),
        scratch_shapes=[pltpu.VMEM((tm_eff, dn_eff), jnp.float32)],
    )
    # TODO(synk): on v6e, if wall-clock still exceeds MXU cadence at tm>=512,
    # bump the weight specs to pipeline_mode=pl.Buffered(3) (VMEM headroom
    # exists on the 128-MiB chips, but NOT on v7x).

    out = pl.pallas_call(
        _swiglu_kernel,
        out_shape=jax.ShapeDtypeStruct((m_pad, d_pad), out_dtype),
        grid_spec=grid_spec,
        compiler_params=pltpu.CompilerParams(
            dimension_semantics=("parallel", "parallel", "arbitrary"),
            vmem_limit_bytes=int(prof["vmem_budget"]),
        ),
        cost_estimate=cost,
    )(x2d, w1, w2, w3)

    return out[:M, :d_model].reshape(orig_shape)


def swiglu_ref(x, w1, w2, w3):
    g = jnp.dot(x, w1, precision=jax.lax.Precision.HIGHEST)
    gate = g * jax.nn.sigmoid(g)
    data = jnp.dot(x, w2, precision=jax.lax.Precision.HIGHEST)
    return jnp.dot(gate * data, w3, precision=jax.lax.Precision.HIGHEST)


if __name__ == "__main__":
    # Module hyper-params (matching SwiGLU.__init__ semantics).
    d_model = 64
    d_ffn = 96
    hidden_dim = int(2 * d_ffn / 3)  # = 64
    batch, seq = 2, 8

    key = jax.random.PRNGKey(0)
    kx, k1, k2, k3 = jax.random.split(key, 4)

    x = jax.random.normal(kx, (batch, seq, d_model), dtype=jnp.float32)
    # Deterministic synthetic weights, stored (in, out) == nn.Linear.weight.T
    # (bias-free, as in the module).
    w1 = jax.random.normal(k1, (d_model, hidden_dim), dtype=jnp.float32) * 0.05
    w2 = jax.random.normal(k2, (d_model, hidden_dim), dtype=jnp.float32) * 0.05
    w3 = jax.random.normal(k3, (hidden_dim, d_model), dtype=jnp.float32) * 0.05

    out = jax.block_until_ready(swiglu_pallas(x, w1, w2, w3))
    ref = swiglu_ref(x, w1, w2, w3)

    assert out.shape == (batch, seq, d_model)
    assert out.dtype == x.dtype
    max_err = float(jnp.max(jnp.abs(out - ref)))
    assert jnp.allclose(out, ref, atol=2e-3, rtol=2e-3), f"mismatch vs reference: {max_err}"

    print("KERNEL_OK")
</pallas_src>

<mosaic_0001>
module attributes {stable_mosaic.version = 11 : i64} {
  func.func @_swiglu_kernel(%arg0: i32, %arg1: i32, %arg2: i32, %arg3: memref<16x64xf32, #tpu.memory_space<vmem>>, %arg4: memref<64x128xf32, #tpu.memory_space<vmem>>, %arg5: memref<64x128xf32, #tpu.memory_space<vmem>>, %arg6: memref<128x128xf32, #tpu.memory_space<vmem>>, %arg7: memref<16x128xf32, #tpu.memory_space<vmem>>, %arg8: memref<16x128xf32, #tpu.memory_space<vmem>>) attributes {dimension_semantics = [#tpu.dimension_semantics<parallel>, #tpu.dimension_semantics<parallel>, #tpu.dimension_semantics<arbitrary>], iteration_bounds = array<i64: 1, 1, 1>, scalar_prefetch = 0 : i64, scratch_operands = 1 : i64, tpu.core_type = #tpu.core_type<tc>, window_params = [{transform_indices = @transform_0, window_bounds = array<i64: 16, 64>}, {transform_indices = @transform_1, window_bounds = array<i64: 64, 128>}, {transform_indices = @transform_2, window_bounds = array<i64: 64, 128>}, {transform_indices = @transform_3, window_bounds = array<i64: 128, 128>}, {transform_indices = @transform_4, window_bounds = array<i64: 16, 128>}]} {
    %c0_i32 = arith.constant 0 : i32
    %0 = arith.cmpi eq, %arg2, %c0_i32 : i32
    %1 = arith.extui %0 : i1 to i32
    %c0_i32_0 = arith.constant 0 : i32
    %2 = arith.cmpi ne, %1, %c0_i32_0 : i32
    scf.if %2 {
      %cst_17 = arith.constant 0.000000e+00 : f32
      %23 = vector.broadcast %cst_17 : f32 to vector<16x128xf32>
      %c0_18 = arith.constant 0 : index
      %c0_19 = arith.constant 0 : index
      %24 = vector.load %arg8[%c0_18, %c0_19] : memref<16x128xf32, #tpu.memory_space<vmem>>, vector<16x128xf32>
      tpu.vector_store %arg8[%c0_18, %c0_19], %23 {strides = array<i32>} : memref<16x128xf32, #tpu.memory_space<vmem>>, vector<16x128xf32>,
    } else {
    }
    %c0 = arith.constant 0 : index
    %c0_1 = arith.constant 0 : index
    %3 = vector.load %arg3[%c0, %c0_1] : memref<16x64xf32, #tpu.memory_space<vmem>>, vector<16x64xf32>
    %c0_2 = arith.constant 0 : index
    %c0_3 = arith.constant 0 : index
    %4 = vector.load %arg4[%c0_2, %c0_3] : memref<64x128xf32, #tpu.memory_space<vmem>>, vector<64x128xf32>
    %cst = arith.constant dense<0.000000e+00> : vector<16x128xf32>
    %5 = tpu.matmul %3, %4, %cst {dimension_numbers = #tpu.dot_dimension_numbers<[1], [0], [0], [1], [0, 0, 1, 1], [], []>} : vector<16x64xf32>, vector<64x128xf32>, vector<16x128xf32> -> vector<16x128xf32>
    %c0_4 = arith.constant 0 : index
    %c0_5 = arith.constant 0 : index
    %6 = vector.load %arg5[%c0_4, %c0_5] : memref<64x128xf32, #tpu.memory_space<vmem>>, vector<64x128xf32>
    %cst_6 = arith.constant dense<0.000000e+00> : vector<16x128xf32>
    %7 = tpu.matmul %3, %6, %cst_6 {dimension_numbers = #tpu.dot_dimension_numbers<[1], [0], [0], [1], [0, 0, 1, 1], [], []>} : vector<16x64xf32>, vector<64x128xf32>, vector<16x128xf32> -> vector<16x128xf32>
    %8 = arith.negf %5 : vector<16x128xf32>
    %9 = math.exp %8 : vector<16x128xf32>
    %cst_7 = arith.constant 1.000000e+00 : f32
    %10 = vector.broadcast %cst_7 : f32 to vector<16x128xf32>
    %11 = arith.addf %10, %9 : vector<16x128xf32>
    %12 = arith.divf %10, %11 : vector<16x128xf32>
    %13 = arith.mulf %5, %12 : vector<16x128xf32>
    %14 = arith.mulf %13, %7 : vector<16x128xf32>
    %c0_8 = arith.constant 0 : index
    %c0_9 = arith.constant 0 : index
    %15 = vector.load %arg8[%c0_8, %c0_9] : memref<16x128xf32, #tpu.memory_space<vmem>>, vector<16x128xf32>
    %c0_10 = arith.constant 0 : index
    %c0_11 = arith.constant 0 : index
    %16 = vector.load %arg6[%c0_10, %c0_11] : memref<128x128xf32, #tpu.memory_space<vmem>>, vector<128x128xf32>
    %cst_12 = arith.constant dense<0.000000e+00> : vector<16x128xf32>
    %17 = tpu.matmul %14, %16, %cst_12 {dimension_numbers = #tpu.dot_dimension_numbers<[1], [0], [0], [1], [0, 0, 1, 1], [], []>} : vector<16x128xf32>, vector<128x128xf32>, vector<16x128xf32> -> vector<16x128xf32>
    %18 = arith.addf %15, %17 : vector<16x128xf32>
    %c0_13 = arith.constant 0 : index
    %c0_14 = arith.constant 0 : index
    %19 = vector.load %arg8[%c0_13, %c0_14] : memref<16x128xf32, #tpu.memory_space<vmem>>, vector<16x128xf32>
    tpu.vector_store %arg8[%c0_13, %c0_14], %18 {strides = array<i32>} : memref<16x128xf32, #tpu.memory_space<vmem>>, vector<16x128xf32>,
    %c0_i32_15 = arith.constant 0 : i32
    %20 = arith.cmpi eq, %arg2, %c0_i32_15 : i32
    %21 = arith.extui %20 : i1 to i32
    %c0_i32_16 = arith.constant 0 : i32
    %22 = arith.cmpi ne, %21, %c0_i32_16 : i32
    scf.if %22 {
      %c0_17 = arith.constant 0 : index
      %c0_18 = arith.constant 0 : index
      %23 = vector.load %arg8[%c0_17, %c0_18] : memref<16x128xf32, #tpu.memory_space<vmem>>, vector<16x128xf32>
      %c0_19 = arith.constant 0 : index
      %c0_20 = arith.constant 0 : index
      %24 = vector.load %arg7[%c0_19, %c0_20] : memref<16x128xf32, #tpu.memory_space<vmem>>, vector<16x128xf32>
      tpu.vector_store %arg7[%c0_19, %c0_20], %23 {strides = array<i32>} : memref<16x128xf32, #tpu.memory_space<vmem>>, vector<16x128xf32>,
    } else {
    }
    return
  }
  func.func @transform_0(%arg0: i32, %arg1: i32, %arg2: i32) -> (i32, i32) {
    %c0_i32 = arith.constant 0 : i32
    %c0_i32_0 = arith.constant 0 : i32
    return %arg0, %c0_i32 : i32, i32
  }
  func.func @transform_1(%arg0: i32, %arg1: i32, %arg2: i32) -> (i32, i32) {
    %c0_i32 = arith.constant 0 : i32
    %c0_i32_0 = arith.constant 0 : i32
    return %c0_i32, %arg2 : i32, i32
  }
  func.func @transform_2(%arg0: i32, %arg1: i32, %arg2: i32) -> (i32, i32) {
    %c0_i32 = arith.constant 0 : i32
    %c0_i32_0 = arith.constant 0 : i32
    return %c0_i32, %arg2 : i32, i32
  }
  func.func @transform_3(%arg0: i32, %arg1: i32, %arg2: i32) -> (i32, i32) {
    %c0_i32 = arith.constant 0 : i32
    return %arg2, %arg1 : i32, i32
  }
  func.func @transform_4(%arg0: i32, %arg1: i32, %arg2: i32) -> (i32, i32) {
    %c0_i32 = arith.constant 0 : i32
    return %arg0, %arg1 : i32, i32
  }
}

</mosaic_0001>

<llo_original>
// kernel: swiglu_pallas.1
$region0: #{swiglu_pallas.1}
  #allocation0 [shape = 'u32[]', space=smem, size = 0x4, offset = 0x4, fixed_abs, tag = 'smem constant byte address 0x4 - core index']
  #allocation1 [shape = 'u32[72,128]{1,0:T(1,128)}', space=vmem, size = 0x9000, scoped, tag = 'internal scratch']
  #allocation2 [shape = 'f32[16,128]{1,0:T(8,128)}', space=vmem, size = 0x2000, scoped, tag = 'scratch operand']
  %s0 = inlined_call_operand.vmem [shape: f32[16,64], index: 0, kind: input, shape index: {}]
  %s1 = inlined_call_operand.vmem [shape: f32[64,128], index: 1, kind: input, shape index: {}]
  %s2 = inlined_call_operand.vmem [shape: f32[64,128], index: 2, kind: input, shape index: {}]
  %s3 = inlined_call_operand.vmem [shape: f32[128,128], index: 3, kind: input, shape index: {}]
  %s4 = inlined_call_operand.vmem [shape: f32[16,128], index: 4, kind: output, shape index: {}]
  %s5 = sld [smem:[#allocation0]]
  $region34: #{swiglu_pallas.1} parent=0
    _
  %s7 = ssub.s32 1, %s5
  %s8 = scalar_select 0, %s7, %s5
  // Predicated region
  $region2: #{swiglu_pallas.1} parent=0 // pred_check
    _
  $region3: #{swiglu_pallas.1} parent=0 // pred_check_branch
    %10 = sbr.rel (0) target = $region5
  $region4: #{swiglu_pallas.1} parent=0 // pred_region
    _
  $region5: #{swiglu_pallas.1} parent=0 // pred_fallthru
    _
  // Predicated region
  $region6: #{swiglu_pallas.1} parent=0 // pred_check
    _
  $region7: #{swiglu_pallas.1} parent=0 // pred_check_branch
    %12 = sbr.rel (0) target = $region9
  $region8: #{swiglu_pallas.1} parent=0 // pred_region
    _
  $region9: #{swiglu_pallas.1} parent=0 // pred_fallthru
    _
  // Predicated region
  $region10: #{swiglu_pallas.1} parent=0 // pred_check
    _
  $region11: #{swiglu_pallas.1} parent=0 // pred_check_branch
    %14 = sbr.rel (0) target = $region13
  $region12: #{swiglu_pallas.1} parent=0 // pred_region
    _
  $region13: #{swiglu_pallas.1} parent=0 // pred_fallthru
    _
  // Predicated region
  $region14: #{swiglu_pallas.1} parent=0 // pred_check
    _
  $region15: #{swiglu_pallas.1} parent=0 // pred_check_branch
    %16 = sbr.rel (0) target = $region17
  $region16: #{swiglu_pallas.1} parent=0 // pred_region
    _
  $region17: #{swiglu_pallas.1} parent=0 // pred_fallthru
    _
  %p17 = scmp.eq.s32.totalorder 0, 0
  // Predicated region
  $region18: #{swiglu_pallas.1} parent=0 // pred_check
    %p18 = pneg %p17
  $region19: #{swiglu_pallas.1} parent=0 // pred_check_branch
    %20 = sbr.rel (%p18) target = $region21
  $region20: #{swiglu_pallas.1} parent=0 // pred_region
    %21 = vst [vmem:[#allocation2] sm:$0xff] 0.0
    %22 = vst [vmem:[#allocation2 + $0x8] sm:$0xff] 0.0
  $region21: #{swiglu_pallas.1} parent=0 // pred_fallthru
    _
  %v23 = vld [vmem:[%s0] sm:$0xff]
  %v24 = vld [vmem:[%s0 + $0x8] sm:$0xff]
  %v25 = vld [vmem:[%s1] sm:$0xff]
  %v26 = vld [vmem:[%s1 + $0x8] sm:$0xff]
  %v27 = vld [vmem:[%s1 + $0x10] sm:$0xff]
  %v28 = vld [vmem:[%s1 + $0x18] sm:$0xff]
  %v29 = vld [vmem:[%s1 + $0x20] sm:$0xff]
  %v30 = vld [vmem:[%s1 + $0x28] sm:$0xff]
  %v31 = vld [vmem:[%s1 + $0x30] sm:$0xff]
  %v32 = vld [vmem:[%s1 + $0x38] sm:$0xff]
  %vm33 = vcmask 523264
  %v35 = vsel %vm33, %v23, 0
  %v38 = vsel %vm33, %v24, 0
  %40 = vmatpush.msra.mxu0 0.0
  %41 = vmatpush.msra.mxu0 0.0
  %42 = vmatpush.msra.mxu0 0.0
  %43 = vmatpush.msra.mxu0 0.0
  %44 = vmatpush.msra.mxu0 0.0
  %45 = vmatpush.msra.mxu0 0.0
  %46 = vmatpush.msra.mxu0 0.0
  %47 = vmatpush.msra.mxu0 0.0
  %48 = vmatpush.msra.mxu0 %v32
  %49 = vmatpush.msra.mxu0 %v31
  %50 = vmatpush.msra.mxu0 %v30
  %51 = vmatpush.msra.mxu0 %v29
  %52 = vmatpush.msra.mxu0 %v28
  %53 = vmatpush.msra.mxu0 %v27
  %54 = vmatpush.msra.mxu0 %v26
  %55 = vmatpush.msra.mxu0 %v25
  %56 = vmatmul.f32.gmra.mxu0 %v35
  %v57 = vpop.f32.mrf.mxu0
  %v58 = vadd.f32 0.0, %v57
  %59 = vmatmul.f32.gmra.mxu0 %v38
  %v60 = vpop.f32.mrf.mxu0
  %v61 = vadd.f32 0.0, %v60
  %62 = vdwg.mxu0
  %v63 = vld [vmem:[%s2] sm:$0xff]
  %v64 = vld [vmem:[%s2 + $0x8] sm:$0xff]
  %v65 = vld [vmem:[%s2 + $0x10] sm:$0xff]
  %v66 = vld [vmem:[%s2 + $0x18] sm:$0xff]
  %v67 = vld [vmem:[%s2 + $0x20] sm:$0xff]
  %v68 = vld [vmem:[%s2 + $0x28] sm:$0xff]
  %v69 = vld [vmem:[%s2 + $0x30] sm:$0xff]
  %v70 = vld [vmem:[%s2 + $0x38] sm:$0xff]
  %71 = vmatpush.msra.mxu0 0.0
  %72 = vmatpush.msra.mxu0 0.0
  %73 = vmatpush.msra.mxu0 0.0
  %74 = vmatpush.msra.mxu0 0.0
  %75 = vmatpush.msra.mxu0 0.0
  %76 = vmatpush.msra.mxu0 0.0
  %77 = vmatpush.msra.mxu0 0.0
  %78 = vmatpush.msra.mxu0 0.0
  %79 = vmatpush.msra.mxu0 %v70
  %80 = vmatpush.msra.mxu0 %v69
  %81 = vmatpush.msra.mxu0 %v68
  %82 = vmatpush.msra.mxu0 %v67
  %83 = vmatpush.msra.mxu0 %v66
  %84 = vmatpush.msra.mxu0 %v65
  %85 = vmatpush.msra.mxu0 %v64
  %86 = vmatpush.msra.mxu0 %v63
  %87 = vmatmul.f32.gmra.mxu0 %v35
  %v88 = vpop.f32.mrf.mxu0
  %v89 = vadd.f32 0.0, %v88
  %90 = vmatmul.f32.gmra.mxu0 %v38
  %v91 = vpop.f32.mrf.mxu0
  %v92 = vadd.f32 0.0, %v91
  %93 = vdwg.mxu0
  %v94 = vxor.u32 %v58, 2147483648
  %v95 = vxor.u32 %v61, 2147483648
  %v96 = vmul.f32 %v94, 1.442695
  %v97 = vpow.pop %v96
  %v98 = vmul.f32 %v95, 1.442695
  %v99 = vpow.pop %v98
  %v100 = vadd.f32 %v97, 1.0
  %v101 = vadd.f32 %v99, 1.0
  %v102 = vrcp.pop %v100
  %v103 = vmul.f32 %v100, %v102
  %v104 = vsub.f32 1.0, %v103
  %v105 = vmul.f32 %v102, %v104
  %v106 = vadd.f32 %v102, %v105
  %vm107 = vweird.f32 %v100
  %vm108 = vweird.f32 %v102
  %vm109 = vmor %vm107, %vm108
  %v110 = vsel %vm109, %v102, %v106
  %v111 = vand.u32 2147483647, %v100
  %vm112 = vcmp.eq.f32.partialorder %v111, 8.507059e+37
  %v113 = vand.u32 %v100, 2147483648
  %v114 = vor.u32 1.1754944e-38, %v113
  %v115 = vsel %vm112, %v114, %v110
  %v116 = vmul.f32 1.0, %v115
  %v117 = vrcp.pop %v101
  %v118 = vmul.f32 %v101, %v117
  %v119 = vsub.f32 1.0, %v118
  %v120 = vmul.f32 %v117, %v119
  %v121 = vadd.f32 %v117, %v120
  %vm122 = vweird.f32 %v101
  %vm123 = vweird.f32 %v117
  %vm124 = vmor %vm122, %vm123
  %v125 = vsel %vm124, %v117, %v121
  %v126 = vand.u32 2147483647, %v101
  %vm127 = vcmp.eq.f32.partialorder %v126, 8.507059e+37
  %v128 = vand.u32 %v101, 2147483648
  %v129 = vor.u32 1.1754944e-38, %v128
  %v130 = vsel %vm127, %v129, %v125
  %v131 = vmul.f32 1.0, %v130
  %v132 = vmul.f32 %v58, %v116
  %v133 = vmul.f32 %v61, %v131
  %v134 = vmul.f32 %v132, %v89
  %v135 = vmul.f32 %v133, %v92
  %v136 = vld [vmem:[#allocation2] sm:$0xff]
  %v137 = vld [vmem:[#allocation2 + $0x8] sm:$0xff]
  %v138 = vld [vmem:[%s3] sm:$0xff]
  %v139 = vld [vmem:[%s3 + $0x8] sm:$0xff]
  %v140 = vld [vmem:[%s3 + $0x10] sm:$0xff]
  %v141 = vld [vmem:[%s3 + $0x18] sm:$0xff]
  %v142 = vld [vmem:[%s3 + $0x20] sm:$0xff]
  %v143 = vld [vmem:[%s3 + $0x28] sm:$0xff]
  %v144 = vld [vmem:[%s3 + $0x30] sm:$0xff]
  %v145 = vld [vmem:[%s3 + $0x38] sm:$0xff]
  %v146 = vld [vmem:[%s3 + $0x40] sm:$0xff]
  %v147 = vld [vmem:[%s3 + $0x48] sm:$0xff]
  %v148 = vld [vmem:[%s3 + $0x50] sm:$0xff]
  %v149 = vld [vmem:[%s3 + $0x58] sm:$0xff]
  %v150 = vld [vmem:[%s3 + $0x60] sm:$0xff]
  %v151 = vld [vmem:[%s3 + $0x68] sm:$0xff]
  %v152 = vld [vmem:[%s3 + $0x70] sm:$0xff]
  %v153 = vld [vmem:[%s3 + $0x78] sm:$0xff]
  %154 = vmatpush.msra.mxu0 %v153
  %155 = vmatpush.msra.mxu0 %v152
  %156 = vmatpush.msra.mxu0 %v151
  %157 = vmatpush.msra.mxu0 %v150
  %158 = vmatpush.msra.mxu0 %v149
  %159 = vmatpush.msra.mxu0 %v148
  %160 = vmatpush.msra.mxu0 %v147
  %161 = vmatpush.msra.mxu0 %v146
  %162 = vmatpush.msra.mxu0 %v145
  %163 = vmatpush.msra.mxu0 %v144
  %164 = vmatpush.msra.mxu0 %v143
  %165 = vmatpush.msra.mxu0 %v142
  %166 = vmatpush.msra.mxu0 %v141
  %167 = vmatpush.msra.mxu0 %v140
  %168 = vmatpush.msra.mxu0 %v139
  %169 = vmatpush.msra.mxu0 %v138
  %170 = vmatmul.f32.gmra.mxu0 %v134
  %v171 = vpop.f32.mrf.mxu0
  %v172 = vadd.f32 0.0, %v171
  %173 = vmatmul.f32.gmra.mxu0 %v135
  %v174 = vpop.f32.mrf.mxu0
  %v175 = vadd.f32 0.0, %v174
  %176 = vdwg.mxu0
  %v177 = vadd.f32 %v136, %v172
  %v178 = vadd.f32 %v137, %v175
  %179 = vst [vmem:[#allocation2] sm:$0xff] %v177
  %180 = vst [vmem:[#allocation2 + $0x8] sm:$0xff] %v178
  // Predicated region
  $region22: #{swiglu_pallas.1} parent=0 // pred_check
    %p181 = pneg %p17
  $region23: #{swiglu_pallas.1} parent=0 // pred_check_branch
    %183 = sbr.rel (%p181) target = $region25
  $region24: #{swiglu_pallas.1} parent=0 // pred_region
    %v184 = vld [vmem:[#allocation2] sm:$0xff]
    %v185 = vld [vmem:[#allocation2 + $0x8] sm:$0xff]
    %186 = vst [vmem:[%s4] sm:$0xff] %v184
    %187 = vst [vmem:[%s4 + $0x8] sm:$0xff] %v185
  $region25: #{swiglu_pallas.1} parent=0 // pred_fallthru
    _
  // Predicated region
  $region26: #{swiglu_pallas.1} parent=0 // pred_check
    _
  $region27: #{swiglu_pallas.1} parent=0 // pred_check_branch
    %189 = sbr.rel (0) target = $region29
  $region28: #{swiglu_pallas.1} parent=0 // pred_region
    _
  $region29: #{swiglu_pallas.1} parent=0 // pred_fallthru
    _
  // Predicated region
  $region30: #{swiglu_pallas.1} parent=0 // pred_check
    _
  $region31: #{swiglu_pallas.1} parent=0 // pred_check_branch
    %191 = sbr.rel (0) target = $region33
  $region32: #{swiglu_pallas.1} parent=0 // pred_region
    _
  $region33: #{swiglu_pallas.1} parent=0 // pred_fallthru
    _

</llo_original>
